<compile_context>
chip_gen: v7x
topology: tpu7x:2x2x1
jax: 0.10.0
libtpu: 0.0.40
codegen_flags: <defaults>
</compile_context>

<pallas_src>
import math

import jax
import jax.numpy as jnp
from jax.experimental import pallas as pl
from jax.experimental.pallas import tpu as pltpu


# ----------------------------- kernels ------------------------------------- #

def _to_rgb_kernel(x_ref, w_ref, b_ref, o_ref):
    # x_ref: (TILE, P*in_dim), w_ref: (P*in_dim, P*dim_rgb), b_ref: (1, P*dim_rgb)
    y = jnp.dot(x_ref[...], w_ref[...], preferred_element_type=jnp.float32)
    o_ref[...] = (y + b_ref[...]).astype(o_ref.dtype)


def _to_rgb_skip_kernel(x_ref, skip_ref, w_ref, b_ref, o_ref):
    y = jnp.dot(x_ref[...], w_ref[...], preferred_element_type=jnp.float32)
    o_ref[...] = (y + b_ref[...] + skip_ref[...].astype(jnp.float32)).astype(o_ref.dtype)


# ----------------------------- helpers ------------------------------------- #

def _round_up(v, m):
    return (v + m - 1) // m * m


def _pick_pack_factor(in_dim):
    """How many points to pack into one lane-row (target ~256-deep contraction)."""
    if in_dim >= 128:
        return 1
    return max(1, 256 // in_dim)


def _pick_tile_rows(rows, lanes_x, lanes_o, x_itemsize, o_itemsize, skip_itemsize,
                    has_skip, *, budget_bytes=20 * 1024 * 1024, min_sublane=8):
    """Largest tile (in packed rows) whose *padded*, double-buffered VMEM blocks fit."""
    lx = _round_up(lanes_x, 128)          # x lanes pad to 128 multiple in VMEM
    lo = _round_up(lanes_o, 128)          # out/skip lanes pad to 128
    per_row = 2 * lx * x_itemsize + 2 * lo * o_itemsize
    if has_skip:
        per_row += 2 * lo * skip_itemsize
    cap = max(min_sublane, budget_bytes // max(1, per_row))

    cands = [c for c in (8192, 4096, 2048, 1024, 512, 256, 128, 64, 32, 16, 8)
             if c <= cap and c <= rows and c % min_sublane == 0]
    if not cands:
        return _round_up(max(rows, 1), min_sublane)
    exact = next((c for c in cands if rows % c == 0), None)
    if exact is not None:
        return exact
    for c in cands:                        # accept <= 12.5% row padding
        if (_round_up(rows, c) - rows) * 8 <= rows:
            return c
    return cands[-1]


# ----------------------------- wrapper ------------------------------------- #

def to_rgb(x, w, b, skip=None, *, tile_rows=None, pack=None):
    """x: (B, N, in_dim); w: (in_dim, dim_rgb); b: (dim_rgb,); skip: (B, N, dim_rgb) or None."""
    B, N, in_dim = x.shape
    dim_rgb = w.shape[-1]
    out_dtype = x.dtype

    x_itemsize = jnp.dtype(x.dtype).itemsize
    o_itemsize = jnp.dtype(out_dtype).itemsize
    skip_itemsize = jnp.dtype(skip.dtype).itemsize if skip is not None else o_itemsize
    min_sublane = max(8, 32 // min(x_itemsize, o_itemsize, skip_itemsize))

    # -- 1. lane packing: P points per row, block-diagonal weight ------------- #
    P = _pick_pack_factor(in_dim) if pack is None else max(1, int(pack))
    packed_in = P * in_dim
    packed_out = P * dim_rgb

    total_points = B * N
    rows = -(-total_points // P)                       # ceil

    # -- 2. tile the packed-row axis (1-D grid), pad rows to a tile multiple -- #
    if tile_rows is None:
        tile_rows = _pick_tile_rows(rows, packed_in, packed_out,
                                    x_itemsize, o_itemsize, skip_itemsize,
                                    skip is not None, min_sublane=min_sublane)
    assert tile_rows % min_sublane == 0, "tile_rows must respect sublane packing"
    rows_padded = _round_up(rows, tile_rows)
    padded_points = rows_padded * P
    pad_points = padded_points - total_points
    grid = (rows_padded // tile_rows,)

    # -- 3. free, contiguous reshapes of operands ----------------------------- #
    x_flat = x.reshape(total_points, in_dim)
    if pad_points:
        x_flat = jnp.pad(x_flat, ((0, pad_points), (0, 0)))
    x_packed = x_flat.reshape(rows_padded, packed_in)

    w_bd = w if P == 1 else jnp.kron(jnp.eye(P, dtype=w.dtype), w)   # (P*in, P*rgb)
    w_bd = w_bd.astype(x.dtype)                                      # bf16 path: bf16 matmul, f32 acc
    b2 = jnp.tile(b.astype(jnp.float32), P).reshape(1, packed_out)

    if skip is not None:
        skip_flat = skip.reshape(total_points, dim_rgb)
        if pad_points:
            skip_flat = jnp.pad(skip_flat, ((0, pad_points), (0, 0)))
        skip_packed = skip_flat.reshape(rows_padded, packed_out)

    # -- 4. specs -------------------------------------------------------------- #
    x_spec = pl.BlockSpec((tile_rows, packed_in), lambda i: (i, 0))
    o_spec = pl.BlockSpec((tile_rows, packed_out), lambda i: (i, 0))
    w_spec = pl.BlockSpec((packed_in, packed_out), lambda i: (0, 0))
    b_spec = pl.BlockSpec((1, packed_out), lambda i: (0, 0))

    bytes_accessed = (
        rows_padded * packed_in * x_itemsize           # read packed x
        + rows_padded * packed_out * o_itemsize        # write out
        + packed_in * packed_out * jnp.dtype(w_bd.dtype).itemsize
        + packed_out * 4                               # bias
    )
    if skip is not None:
        bytes_accessed += rows_padded * packed_out * skip_itemsize
    cost = pl.CostEstimate(
        flops=2 * rows_padded * packed_in * packed_out,
        transcendentals=0,
        bytes_accessed=bytes_accessed,
    )

    compiler_params = pltpu.CompilerParams(
        dimension_semantics=("parallel",),
        vmem_limit_bytes=32 * 1024 * 1024,
    )

    if skip is None:
        kernel = _to_rgb_kernel
        in_specs = [x_spec, w_spec, b_spec]
        operands = (x_packed, w_bd, b2)
    else:
        kernel = _to_rgb_skip_kernel
        in_specs = [x_spec, o_spec, w_spec, b_spec]
        operands = (x_packed, skip_packed, w_bd, b2)

    out_packed = pl.pallas_call(
        kernel,
        out_shape=jax.ShapeDtypeStruct((rows_padded, packed_out), out_dtype),
        grid_spec=pltpu.PrefetchScalarGridSpec(
            num_scalar_prefetch=0,
            grid=grid,
            in_specs=in_specs,
            out_specs=o_spec,
        ),
        compiler_params=compiler_params,
        cost_estimate=cost,
    )(*operands)

    # -- 5. free reshape back to (B, N, dim_rgb), dropping row padding -------- #
    out_flat = out_packed.reshape(padded_points, dim_rgb)
    if pad_points:
        out_flat = out_flat[:total_points]
    return out_flat.reshape(B, N, dim_rgb)


def to_rgb_ref(x, w, b, skip=None):
    out = x @ w + b
    if skip is not None:
        out = out + skip
    return out


# ------------------------------- test --------------------------------------- #

if __name__ == "__main__":
    B, Hs, Ws = 2, 16, 16          # small spatial grid -> N = 256 points
    N = Hs * Ws
    in_dim, dim_rgb = 32, 3

    key = jax.random.PRNGKey(0)
    kx, ks, kw, kb = jax.random.split(key, 4)

    x = jax.random.normal(kx, (B, N, in_dim), dtype=jnp.float32)
    skip = jax.random.normal(ks, (B, N, dim_rgb), dtype=jnp.float32)

    # nn.Linear-style uniform init, stored as (in, out).
    bound = 1.0 / math.sqrt(in_dim)
    w = jax.random.uniform(kw, (in_dim, dim_rgb), jnp.float32, -bound, bound)
    b = jax.random.uniform(kb, (dim_rgb,), jnp.float32, -bound, bound)

    # 1) no-skip path, explicit tile -> exercises a multi-step 1-D grid.
    out_plain = to_rgb(x, w, b, tile_rows=16)
    # 2) skip path, auto pack (P=8 -> 256-lane rows) + auto tile.
    out_skip = to_rgb(x, w, b, skip=skip)
    jax.block_until_ready((out_plain, out_skip))

    ref_plain = to_rgb_ref(x, w, b)
    ref_skip = to_rgb_ref(x, w, b, skip)
    assert jnp.allclose(out_plain, ref_plain, atol=1e-5, rtol=1e-5), "mismatch (no skip)"
    assert jnp.allclose(out_skip, ref_skip, atol=1e-5, rtol=1e-5), "mismatch (skip)"

    # 3) ragged N -> exercises the wrapper-side row padding / slicing.
    Nr = 250
    xr = jax.random.normal(kx, (B, Nr, in_dim), dtype=jnp.float32)
    out_r = to_rgb(xr, w, b)
    jax.block_until_ready(out_r)
    assert jnp.allclose(out_r, to_rgb_ref(xr, w, b), atol=1e-5, rtol=1e-5), "mismatch (ragged N)"

    # 4) bf16 input path (f32 accumulation, cast at store).
    x_bf = x.astype(jnp.bfloat16)
    out_bf = to_rgb(x_bf, w, b)
    jax.block_until_ready(out_bf)
    ref_bf = (x_bf.astype(jnp.float32) @ w.astype(jnp.bfloat16).astype(jnp.float32) + b)
    assert jnp.allclose(out_bf.astype(jnp.float32), ref_bf, atol=5e-2, rtol=5e-2), "mismatch (bf16)"

    # TODO(synk): the use_equal_fc=True branch (mod_conv_fc.EqualLinear) is an external
    # class not included in the spec; only the default nn.Linear path is implemented.

    print("KERNEL_OK")
</pallas_src>

<mosaic_0001>
module attributes {stable_mosaic.version = 11 : i64} {
  func.func @_to_rgb_kernel(%arg0: i32, %arg1: memref<16x256xf32, #tpu.memory_space<vmem>>, %arg2: memref<256x24xf32, #tpu.memory_space<vmem>>, %arg3: memref<1x24xf32, #tpu.memory_space<vmem>>, %arg4: memref<16x24xf32, #tpu.memory_space<vmem>>) attributes {dimension_semantics = [#tpu.dimension_semantics<parallel>], iteration_bounds = array<i64: 4>, scalar_prefetch = 0 : i64, scratch_operands = 0 : i64, tpu.core_type = #tpu.core_type<tc>, window_params = [{transform_indices = @transform_0, window_bounds = array<i64: 16, 256>}, {pipeline_mode = #tpu.pipeline_mode<synchronous>, transform_indices = @transform_1, window_bounds = array<i64: 256, 24>}, {pipeline_mode = #tpu.pipeline_mode<synchronous>, transform_indices = @transform_2, window_bounds = array<i64: 1, 24>}, {transform_indices = @transform_3, window_bounds = array<i64: 16, 24>}]} {
    %c0 = arith.constant 0 : index
    %c0_0 = arith.constant 0 : index
    %0 = vector.load %arg1[%c0, %c0_0] : memref<16x256xf32, #tpu.memory_space<vmem>>, vector<16x256xf32>
    %c0_1 = arith.constant 0 : index
    %c0_2 = arith.constant 0 : index
    %1 = vector.load %arg2[%c0_1, %c0_2] : memref<256x24xf32, #tpu.memory_space<vmem>>, vector<256x24xf32>
    %cst = arith.constant dense<0.000000e+00> : vector<16x24xf32>
    %2 = tpu.matmul %0, %1, %cst {dimension_numbers = #tpu.dot_dimension_numbers<[1], [0], [0], [1], [0, 0, 1, 1], [], []>} : vector<16x256xf32>, vector<256x24xf32>, vector<16x24xf32> -> vector<16x24xf32>
    %c0_3 = arith.constant 0 : index
    %c0_4 = arith.constant 0 : index
    %3 = vector.load %arg3[%c0_3, %c0_4] : memref<1x24xf32, #tpu.memory_space<vmem>>, vector<1x24xf32>
    %4 = vector.broadcast %3 : vector<1x24xf32> to vector<16x24xf32>
    %5 = arith.addf %2, %4 : vector<16x24xf32>
    %c0_5 = arith.constant 0 : index
    %c0_6 = arith.constant 0 : index
    %6 = vector.load %arg4[%c0_5, %c0_6] : memref<16x24xf32, #tpu.memory_space<vmem>>, vector<16x24xf32>
    tpu.vector_store %arg4[%c0_5, %c0_6], %5 {strides = array<i32>} : memref<16x24xf32, #tpu.memory_space<vmem>>, vector<16x24xf32>,
    return
  }
  func.func @transform_0(%arg0: i32) -> (i32, i32) {
    %c0_i32 = arith.constant 0 : i32
    %c0_i32_0 = arith.constant 0 : i32
    return %arg0, %c0_i32 : i32, i32
  }
  func.func @transform_1(%arg0: i32) -> (i32, i32) {
    %c0_i32 = arith.constant 0 : i32
    %c0_i32_0 = arith.constant 0 : i32
    %c0_i32_1 = arith.constant 0 : i32
    return %c0_i32, %c0_i32_0 : i32, i32
  }
  func.func @transform_2(%arg0: i32) -> (i32, i32) {
    %c0_i32 = arith.constant 0 : i32
    %c0_i32_0 = arith.constant 0 : i32
    %c0_i32_1 = arith.constant 0 : i32
    return %c0_i32, %c0_i32_0 : i32, i32
  }
  func.func @transform_3(%arg0: i32) -> (i32, i32) {
    %c0_i32 = arith.constant 0 : i32
    %c0_i32_0 = arith.constant 0 : i32
    return %arg0, %c0_i32 : i32, i32
  }
}

</mosaic_0001>

<llo_original>
// kernel: tpu_custom_call.1
$region0: #{tpu_custom_call.1}
  #allocation0 [shape = 'u32[]', space=smem, size = 0x4, offset = 0x4, fixed_abs, tag = 'smem constant byte address 0x4 - core index']
  #allocation1 [shape = 'u32[144,128]{1,0:T(1,128)}', space=vmem, size = 0x12000, scoped, tag = 'internal scratch']
  %s0 = inlined_call_operand.vmem [shape: f32[64,256], index: 0, kind: input, shape index: {}]
  %s1 = inlined_call_operand.vmem [shape: f32[256,24], index: 1, kind: input, shape index: {}]
  %s2 = inlined_call_operand.vmem [shape: f32[1,24], index: 2, kind: input, shape index: {}]
  %s3 = inlined_call_operand.vmem [shape: f32[64,24], index: 3, kind: output, shape index: {}]
  %s4 = sld [smem:[#allocation0]]
  $region45: #{tpu_custom_call.1} parent=0
    _
  %s6 = ssub.s32 1, %s4
  %s7 = scalar_select 0, %s6, %s4
  loop: start=0, step=1, limit=6
  $region2: #{tpu_custom_call.1} parent=0 // loop_pre_header
    _
  $region3: #{tpu_custom_call.1} parent=0 // loop_header
    %s9 = sphi 0, %s13
    %p10 = scmp.ge.s32.totalorder %s9, 6
    %s19 = sphi 0, %s21
    %s22 = sphi 0, %s19
    %s23 = sphi 0, %s22
    %s39 = sphi 0, %s23
    %s43 = sphi 0, %s43
    %s45 = sphi 0, %s43
    %s46 = sphi 0, %s45
    %s60 = sphi 0, %s46
    %s64 = sphi 0, %s64
    %s66 = sphi 0, %s64
    %s67 = sphi 0, %s66
    %s81 = sphi 0, %s67
    %s87 = sphi 0, %s89
    %s90 = sphi 0, %s87
    %s91 = sphi 0, %s90
    %s107 = sphi 0, %s91
  $region4: #{tpu_custom_call.1} parent=0 // loop_header_branch
    %12 = sbr.rel (%p10) target = $region8
  $region5: #{tpu_custom_call.1} parent=0 // loop_body
    %s14 = ssub.s32 %s9, 1
    %s15 = ssub.s32 %s9, 2
    %s16 = sadd.s32 %s9, 1
    %s17 = ssub.s32 %s9, %s16
    %p18 = scmp.eq.s32.totalorder %s17, 0
    %s20 = sadd.s32 %s19, 1
    %s21 = scalar_select %p18, %s19, %s20
    %p24 = pneg %p18
    %p25 = scmp.eq.s32.totalorder %s9, 3
    %p26 = por %p24, %p25
    %p27 = scmp.ne.s32.totalorder %s19, %s22
    %p28 = scmp.eq.s32.totalorder %s9, 0
    %p29 = por %p27, %p28
    %p30 = scmp.ne.s32.totalorder %s19, %s22
    %p31 = scmp.eq.s32.totalorder %s14, 3
    %p32 = por %p30, %p31
    %p33 = scmp.ne.s32.totalorder %s22, %s23
    %p34 = scmp.eq.s32.totalorder %s14, 0
    %p35 = por %p33, %p34
    %p36 = scmp.ne.s32.totalorder %s22, %s23
    %p37 = scmp.eq.s32.totalorder %s15, 3
    %p38 = por %p36, %p37
    %p40 = scmp.ne.s32.totalorder %s23, %s39
    %p41 = scmp.eq.s32.totalorder %s15, 0
    %p42 = por %p40, %p41
    %s44 = sadd.s32 %s43, 1
    %p47 = scmp.eq.s32.totalorder %s9, 3
    %p48 = scmp.ne.s32.totalorder %s43, %s45
    %p49 = scmp.eq.s32.totalorder %s9, 0
    %p50 = por %p48, %p49
    %p51 = scmp.ne.s32.totalorder %s43, %s45
    %p52 = scmp.eq.s32.totalorder %s14, 3
    %p53 = por %p51, %p52
    %p54 = scmp.ne.s32.totalorder %s45, %s46
    %p55 = scmp.eq.s32.totalorder %s14, 0
    %p56 = por %p54, %p55
    %p57 = scmp.ne.s32.totalorder %s45, %s46
    %p58 = scmp.eq.s32.totalorder %s15, 3
    %p59 = por %p57, %p58
    %p61 = scmp.ne.s32.totalorder %s46, %s60
    %p62 = scmp.eq.s32.totalorder %s15, 0
    %p63 = por %p61, %p62
    %s65 = sadd.s32 %s64, 1
    %p68 = scmp.eq.s32.totalorder %s9, 3
    %p69 = scmp.ne.s32.totalorder %s64, %s66
    %p70 = scmp.eq.s32.totalorder %s9, 0
    %p71 = por %p69, %p70
    %p72 = scmp.ne.s32.totalorder %s64, %s66
    %p73 = scmp.eq.s32.totalorder %s14, 3
    %p74 = por %p72, %p73
    %p75 = scmp.ne.s32.totalorder %s66, %s67
    %p76 = scmp.eq.s32.totalorder %s14, 0
    %p77 = por %p75, %p76
    %p78 = scmp.ne.s32.totalorder %s66, %s67
    %p79 = scmp.eq.s32.totalorder %s15, 3
    %p80 = por %p78, %p79
    %p82 = scmp.ne.s32.totalorder %s67, %s81
    %p83 = scmp.eq.s32.totalorder %s15, 0
    %p84 = por %p82, %p83
    %s85 = ssub.s32 %s9, %s16
    %p86 = scmp.eq.s32.totalorder %s85, 0
    %s88 = sadd.s32 %s87, 1
    %s89 = scalar_select %p86, %s87, %s88
    %p92 = pneg %p86
    %p93 = scmp.eq.s32.totalorder %s9, 3
    %p94 = por %p92, %p93
    %p95 = scmp.ne.s32.totalorder %s87, %s90
    %p96 = scmp.eq.s32.totalorder %s9, 0
    %p97 = por %p95, %p96
    %p98 = scmp.ne.s32.totalorder %s87, %s90
    %p99 = scmp.eq.s32.totalorder %s14, 3
    %p100 = por %p98, %p99
    %p101 = scmp.ne.s32.totalorder %s90, %s91
    %p102 = scmp.eq.s32.totalorder %s14, 0
    %p103 = por %p101, %p102
    %p104 = scmp.ne.s32.totalorder %s90, %s91
    %p105 = scmp.eq.s32.totalorder %s15, 3
    %p106 = por %p104, %p105
    %p108 = scmp.ne.s32.totalorder %s91, %s107
    %p109 = scmp.eq.s32.totalorder %s15, 0
    %p110 = por %p108, %p109
    %p111 = scmp.le.s32.totalorder 1, %s9
    %p112 = scmp.lt.s32.totalorder %s9, 5
    %p113 = pnand %p111, %p112
    %p114 = pneg %p113
    // Predicated region
    $region9: #{tpu_custom_call.1} parent=5 // pred_check
      _
    $region10: #{tpu_custom_call.1} parent=5 // pred_check_branch
      %116 = sbr.rel (%p113) target = $region12
    $region11: #{tpu_custom_call.1} parent=5 // pred_region
      %s117 = ssub.s32 %s9, 1
      // Predicated region
      $region13: #{tpu_custom_call.1} parent=11 // pred_check
        %p118 = pneg %p56
      $region14: #{tpu_custom_call.1} parent=11 // pred_check_branch
        %120 = sbr.rel (%p118) target = $region16
      $region15: #{tpu_custom_call.1} parent=11 // pred_region
        _
      $region16: #{tpu_custom_call.1} parent=11 // pred_fallthru
        _
      // Predicated region
      $region17: #{tpu_custom_call.1} parent=11 // pred_check
        %p121 = pneg %p77
      $region18: #{tpu_custom_call.1} parent=11 // pred_check_branch
        %123 = sbr.rel (%p121) target = $region20
      $region19: #{tpu_custom_call.1} parent=11 // pred_region
        _
      $region20: #{tpu_custom_call.1} parent=11 // pred_fallthru
        _
    $region12: #{tpu_custom_call.1} parent=5 // pred_fallthru
      _
    %p124 = scmp.lt.s32.totalorder %s9, 4
    // Predicated region
    $region21: #{tpu_custom_call.1} parent=5 // pred_check
      %p125 = pneg %p124
    $region22: #{tpu_custom_call.1} parent=5 // pred_check_branch
      %127 = sbr.rel (%p125) target = $region24
    $region23: #{tpu_custom_call.1} parent=5 // pred_region
      // Predicated region
      $region25: #{tpu_custom_call.1} parent=23 // pred_check
        %p128 = pneg %p29
      $region26: #{tpu_custom_call.1} parent=23 // pred_check_branch
        %130 = sbr.rel (%p128) target = $region28
      $region27: #{tpu_custom_call.1} parent=23 // pred_region
        %s131 = smul.u32 2, %s9
        %p132 = scmp.lt.s32.totalorder %s131, 7
        %s133 = scalar_select %p132, %s131, 7
        %s134 = smul.addr %s133, 2
        %s135 = smul.addr %s134, 8
        %s136 = scalar_lea.vmem %s0, %s135
        %s137 = smul.u32 2, %s9
      $region28: #{tpu_custom_call.1} parent=23 // pred_fallthru
        _
    $region24: #{tpu_custom_call.1} parent=5 // pred_fallthru
      _
    %p138 = scmp.le.s32.totalorder 1, %s9
    %p139 = scmp.lt.s32.totalorder %s9, 5
    %p140 = pnand %p138, %p139
    %p141 = pneg %p140
    // Predicated region
    $region29: #{tpu_custom_call.1} parent=5 // pred_check
      _
    $region30: #{tpu_custom_call.1} parent=5 // pred_check_branch
      %143 = sbr.rel (%p140) target = $region32
    $region31: #{tpu_custom_call.1} parent=5 // pred_region
      %s144 = ssub.s32 %s9, 1
      %s145 = smul.u32 2, %s14
      %p146 = scmp.lt.s32.totalorder %s145, 7
      %s147 = scalar_select %p146, %s145, 7
      %s148 = smul.addr %s147, 2
      %s149 = smul.addr %s148, 8
      %s150 = scalar_lea.vmem %s0, %s149
      %p151 = pneg %p35
      %p152 = pneg %p32
      %p153 = pneg %p56
      %p154 = pneg %p53
      %p155 = pneg %p77
      %p156 = pneg %p74
      %p157 = pneg %p103
      %p158 = pneg %p100
      %s159 = smul.u32 2, %s14
      %p160 = scmp.lt.s32.totalorder %s159, 7
      %s161 = scalar_select %p160, %s159, 7
      %s162 = smul.addr %s161, 8
      %s163 = scalar_lea.vmem %s3, %s162
      %s164 = smul.u32 2, %s14
      %p165 = scmp.lt.s32.totalorder %s164, 7
      %s166 = scalar_select %p165, %s164, 7
      %s167 = smul.addr %s166, 2
      %s168 = smul.addr %s167, 8
      %s169 = scalar_lea.vmem %s0, %s168
      %s170 = smul.u32 2, %s14
      %s171 = smul.u32 2, %s14
      %p172 = scmp.lt.s32.totalorder %s171, 7
      %s173 = scalar_select %p172, %s171, 7
      %s174 = smul.addr %s173, 8
      %s175 = scalar_lea.vmem %s3, %s174
      %s176 = smul.u32 2, %s14
      %v177 = vld [vmem:[%s169] sm:$0xff]
      %v178 = vld [vmem:[%s169 + $0x8] sm:$0xff]
      %v179 = vld [vmem:[%s169 + $0x10] sm:$0xff]
      %v180 = vld [vmem:[%s169 + $0x18] sm:$0xff]
      %v181 = vld [vmem:[%s1] sm:$0xff]
      %v182 = vld [vmem:[%s1 + $0x8] sm:$0xff]
      %v183 = vld [vmem:[%s1 + $0x10] sm:$0xff]
      %v184 = vld [vmem:[%s1 + $0x18] sm:$0xff]
      %v185 = vld [vmem:[%s1 + $0x20] sm:$0xff]
      %v186 = vld [vmem:[%s1 + $0x28] sm:$0xff]
      %v187 = vld [vmem:[%s1 + $0x30] sm:$0xff]
      %v188 = vld [vmem:[%s1 + $0x38] sm:$0xff]
      %v189 = vld [vmem:[%s1 + $0x40] sm:$0xff]
      %v190 = vld [vmem:[%s1 + $0x48] sm:$0xff]
      %v191 = vld [vmem:[%s1 + $0x50] sm:$0xff]
      %v192 = vld [vmem:[%s1 + $0x58] sm:$0xff]
      %v193 = vld [vmem:[%s1 + $0x60] sm:$0xff]
      %v194 = vld [vmem:[%s1 + $0x68] sm:$0xff]
      %v195 = vld [vmem:[%s1 + $0x70] sm:$0xff]
      %v196 = vld [vmem:[%s1 + $0x78] sm:$0xff]
      %v197 = vld [vmem:[%s1 + $0x80] sm:$0xff]
      %v198 = vld [vmem:[%s1 + $0x88] sm:$0xff]
      %v199 = vld [vmem:[%s1 + $0x90] sm:$0xff]
      %v200 = vld [vmem:[%s1 + $0x98] sm:$0xff]
      %v201 = vld [vmem:[%s1 + $0xa0] sm:$0xff]
      %v202 = vld [vmem:[%s1 + $0xa8] sm:$0xff]
      %v203 = vld [vmem:[%s1 + $0xb0] sm:$0xff]
      %v204 = vld [vmem:[%s1 + $0xb8] sm:$0xff]
      %v205 = vld [vmem:[%s1 + $0xc0] sm:$0xff]
      %v206 = vld [vmem:[%s1 + $0xc8] sm:$0xff]
      %v207 = vld [vmem:[%s1 + $0xd0] sm:$0xff]
      %v208 = vld [vmem:[%s1 + $0xd8] sm:$0xff]
      %v209 = vld [vmem:[%s1 + $0xe0] sm:$0xff]
      %v210 = vld [vmem:[%s1 + $0xe8] sm:$0xff]
      %v211 = vld [vmem:[%s1 + $0xf0] sm:$0xff]
      %v212 = vld [vmem:[%s1 + $0xf8] sm:$0xff]
      %v213 = vld [vmem:[%s2] sm:$0x1]
      %v215 = vlaneseq
      %v216 = vshrl.u32 %v215, 7
      %v217 = vsub.s32 0, %v216
      %v218 = vrot.slane %v213, %v217
      %220 = vmatprep.subr.mxu0 0.0
      %221 = vmatpush1.msra.mxu0 %v181
      %222 = vmatprep.subr.mxu0 0.0
      %223 = vmatpush1.msra.mxu0 %v182
      %224 = vmatprep.subr.mxu0 0.0
      %225 = vmatpush1.msra.mxu0 %v183
      %226 = vmatprep.subr.mxu0 0.0
      %227 = vmatpush1.msra.mxu0 %v184
      %228 = vmatprep.subr.mxu0 0.0
      %229 = vmatpush1.msra.mxu0 %v185
      %230 = vmatprep.subr.mxu0 0.0
      %231 = vmatpush1.msra.mxu0 %v186
      %232 = vmatprep.subr.mxu0 0.0
      %233 = vmatpush1.msra.mxu0 %v187
      %234 = vmatprep.subr.mxu0 0.0
      %235 = vmatpush1.msra.mxu0 %v188
      %236 = vmatprep.subr.mxu0 0.0
      %237 = vmatpush1.msra.mxu0 %v189
      %238 = vmatprep.subr.mxu0 0.0
      %239 = vmatpush1.msra.mxu0 %v190
      %240 = vmatprep.subr.mxu0 0.0
      %241 = vmatpush1.msra.mxu0 %v191
      %242 = vmatprep.subr.mxu0 0.0
      %243 = vmatpush1.msra.mxu0 %v192
      %244 = vmatprep.subr.mxu0 0.0
      %245 = vmatpush1.msra.mxu0 %v193
      %246 = vmatprep.subr.mxu0 0.0
      %247 = vmatpush1.msra.mxu0 %v194
      %248 = vmatprep.subr.mxu0 0.0
      %249 = vmatpush1.msra.mxu0 %v195
      %250 = vmatprep.subr.mxu0 0.0
      %251 = vmatpush1.msra.mxu0 %v196
      %252 = vmatprep.subr.mxu0 0.0
      %253 = vmatpush1.msra.mxu0 %v197
      %254 = vmatprep.subr.mxu0 0.0
      %255 = vmatpush1.msra.mxu0 %v198
      %256 = vmatprep.subr.mxu0 0.0
      %257 = vmatpush1.msra.mxu0 %v199
      %258 = vmatprep.subr.mxu0 0.0
      %259 = vmatpush1.msra.mxu0 %v200
      %260 = vmatprep.subr.mxu0 0.0
      %261 = vmatpush1.msra.mxu0 %v201
      %262 = vmatprep.subr.mxu0 0.0
      %263 = vmatpush1.msra.mxu0 %v202
      %264 = vmatprep.subr.mxu0 0.0
      %265 = vmatpush1.msra.mxu0 %v203
      %266 = vmatprep.subr.mxu0 0.0
      %267 = vmatpush1.msra.mxu0 %v204
      %268 = vmatprep.subr.mxu0 0.0
      %269 = vmatpush1.msra.mxu0 %v205
      %270 = vmatprep.subr.mxu0 0.0
      %271 = vmatpush1.msra.mxu0 %v206
      %272 = vmatprep.subr.mxu0 0.0
      %273 = vmatpush1.msra.mxu0 %v207
      %274 = vmatprep.subr.mxu0 0.0
      %275 = vmatpush1.msra.mxu0 %v208
      %276 = vmatprep.subr.mxu0 0.0
      %277 = vmatpush1.msra.mxu0 %v209
      %278 = vmatprep.subr.mxu0 0.0
      %279 = vmatpush1.msra.mxu0 %v210
      %280 = vmatprep.subr.mxu0 0.0
      %281 = vmatpush1.msra.mxu0 %v211
      %282 = vmatprep.subr.mxu0 0.0
      %283 = vmatpush1.msra.mxu0 %v212
      %284 = vmatprep.mubr.f32.mxu0 %v178
      %285 = vmatmul.mubr.f32.gmra.mrb[0].mxu0 %v177
      %v286 = vpop.f32.mrb[0].mxu0
      %v287 = vadd.f32 %v218, %v286
      %v288 = vpop.f32.mrb[0].mxu0
      %289 = vmatprep.mubr.f32.mxu0 %v180
      %290 = vmatmul.mubr.f32.gmra.mrb[0].mxu0 %v179
      %v291 = vpop.f32.mrb[0].mxu0
      %v292 = vadd.f32 %v218, %v291
      %v293 = vpop.f32.mrb[0].mxu0
      %294 = vdwg.mxu0
      %vm295 = vcmask 195584
      %296 = vst.msk [vmem:[%s175] sm:$0xff] %vm295, %v287
      %297 = vst.msk [vmem:[%s175 + $0x8] sm:$0xff] %vm295, %v292
      %s298 = smul.u32 2, %s14
      %p299 = scmp.lt.s32.totalorder %s298, 7
      %s300 = scalar_select %p299, %s298, 7
      %s301 = smul.addr %s300, 8
      %s302 = scalar_lea.vmem %s3, %s301
      // Predicated region
      $region33: #{tpu_custom_call.1} parent=31 // pred_check
        %p303 = pneg %p100
      $region34: #{tpu_custom_call.1} parent=31 // pred_check_branch
        %305 = sbr.rel (%p303) target = $region36
      $region35: #{tpu_custom_call.1} parent=31 // pred_region
        %s306 = smul.u32 2, %s14
      $region36: #{tpu_custom_call.1} parent=31 // pred_fallthru
        _
    $region32: #{tpu_custom_call.1} parent=5 // pred_fallthru
      _
    %p307 = scmp.le.s32.totalorder 2, %s9
    // Predicated region
    $region37: #{tpu_custom_call.1} parent=5 // pred_check
      %p308 = pneg %p307
    $region38: #{tpu_custom_call.1} parent=5 // pred_check_branch
      %310 = sbr.rel (%p308) target = $region40
    $region39: #{tpu_custom_call.1} parent=5 // pred_region
      %s311 = ssub.s32 %s9, 2
      // Predicated region
      $region41: #{tpu_custom_call.1} parent=39 // pred_check
        %p312 = pneg %p106
      $region42: #{tpu_custom_call.1} parent=39 // pred_check_branch
        %314 = sbr.rel (%p312) target = $region44
      $region43: #{tpu_custom_call.1} parent=39 // pred_region
        %s315 = smul.u32 2, %s15
        %p316 = scmp.lt.s32.totalorder %s315, 7
        %s317 = scalar_select %p316, %s315, 7
        %s318 = smul.addr %s317, 8
        %s319 = scalar_lea.vmem %s3, %s318
      $region44: #{tpu_custom_call.1} parent=39 // pred_fallthru
        _
    $region40: #{tpu_custom_call.1} parent=5 // pred_fallthru
      _
  $region6: #{tpu_custom_call.1} parent=0 // loop_footer
    %s13 = sadd.s32 1, %s9
  $region7: #{tpu_custom_call.1} parent=0 // loop_footer_branch
    %8 = sbr.rel target = $region3
  $region8: #{tpu_custom_call.1} parent=0 // loop_exit
    _

</llo_original>
